<compile_context>
chip_gen: v7x
topology: tpu7x:2x2x1
jax: 0.10.0
libtpu: 0.0.40
codegen_flags: <defaults>
</compile_context>

<pallas_src>
import jax
import jax.numpy as jnp
from jax.experimental import pallas as pl
from jax.experimental.pallas import tpu as pltpu


# ------------------------------ helpers -------------------------------------

def _pick_block(dim, target, floor):
    """Largest divisor of `dim` (halving from `target`) that is >= floor,
    else the full dim (full-dim blocks are always layout-legal)."""
    if dim <= target:
        return dim
    t = target
    while t >= floor:
        if dim % t == 0:
            return t
        t //= 2
    return dim


# --------------------- projection kernel: x @ W -> heads ---------------------

def _proj_heads_kernel(x_ref, w_ref, o_ref, acc_ref):
    # x: (1, TM, TK); w: (G, TK, D); out: (1, G, TM, D); acc: (G, TM, D) f32.
    @pl.when(pl.program_id(2) == 0)
    def _():
        acc_ref[...] = jnp.zeros_like(acc_ref)

    x = x_ref[0]                                      # (TM, TK)
    for g in range(acc_ref.shape[0]):                 # static unroll over heads
        acc_ref[g] += jnp.dot(x, w_ref[g], preferred_element_type=jnp.float32)

    @pl.when(pl.program_id(2) == pl.num_programs(2) - 1)
    def _():
        o_ref[0] = acc_ref[...].astype(o_ref.dtype)


def proj_heads(x, w, *, tm=256, tk=2048):
    """x: (B, N, Cin); w: (G, Cin, D)  ->  (B, G, N, D) = einsum('bnc,gcd->bgnd').

    The per-head output layout is produced directly by the output BlockSpec
    (no wrapper transpose). The K axis is tiled + accumulated; for typical
    channel counts it collapses to a single K step.
    """
    B, N, Cin = x.shape
    G, _, D = w.shape
    tm = _pick_block(N, tm, 8)
    tk = _pick_block(Cin, tk, 128)
    grid = (B, N // tm, Cin // tk)
    return pl.pallas_call(
        _proj_heads_kernel,
        out_shape=jax.ShapeDtypeStruct((B, G, N, D), x.dtype),
        grid_spec=pltpu.PrefetchScalarGridSpec(
            num_scalar_prefetch=0,
            grid=grid,
            in_specs=[
                pl.BlockSpec((1, tm, tk), lambda b, n, kk: (b, n, kk)),
                pl.BlockSpec((G, tk, D), lambda b, n, kk: (0, kk, 0)),
            ],
            out_specs=pl.BlockSpec((1, G, tm, D), lambda b, n, kk: (b, 0, n, 0)),
            scratch_shapes=[pltpu.VMEM((G, tm, D), jnp.float32)],
        ),
        compiler_params=pltpu.CompilerParams(
            dimension_semantics=("parallel", "parallel", "arbitrary"),
            vmem_limit_bytes=32 * 1024 * 1024,
        ),
    )(x, w)


# -------------- fused flash attention + output projection kernel -------------

def _attn_kernel(q_ref, k_ref, v_ref, bias_ref, wo_ref, bo_ref, o_ref,
                 m_sc, l_sc, acc_sc):
    # q: (1, H, TQ, D); k/v: (1, H, TKV, D); bias: (1, 1, TKV);
    # wo: (H, D, O); bo: (1, O); out: (1, TQ, O).
    kv_i = pl.program_id(2)

    @pl.when(kv_i == 0)
    def _():
        m_sc[...] = jnp.full_like(m_sc, -jnp.inf)
        l_sc[...] = jnp.zeros_like(l_sc)
        acc_sc[...] = jnp.zeros_like(acc_sc)

    q = q_ref[0]                                   # (H, TQ, D); scale folded in
    k = k_ref[0]                                   # (H, TKV, D)
    v = v_ref[0]                                   # (H, TKV, D)

    sim = jnp.einsum("hqd,hkd->hqk", q, k,
                     preferred_element_type=jnp.float32)     # (H, TQ, TKV)
    sim = sim + bias_ref[0]                                  # additive mask bias

    m_prev = m_sc[...]
    m_new = jnp.maximum(m_prev, jnp.max(sim, axis=-1, keepdims=True))
    alpha = jnp.exp(m_prev - m_new)
    p = jnp.exp(sim - m_new)
    l_sc[...] = alpha * l_sc[...] + jnp.sum(p, axis=-1, keepdims=True)
    acc_sc[...] = alpha * acc_sc[...] + jnp.einsum(
        "hqk,hkd->hqd", p, v, preferred_element_type=jnp.float32)
    m_sc[...] = m_new

    @pl.when(kv_i == pl.num_programs(2) - 1)
    def _():
        ctx = acc_sc[...] * pl.reciprocal(l_sc[...], approx=True)   # (H, TQ, D)
        out = jnp.zeros(o_ref.shape[1:], jnp.float32)               # (TQ, O)
        for h in range(ctx.shape[0]):                               # static unroll
            out = out + jnp.dot(ctx[h], wo_ref[h],
                                preferred_element_type=jnp.float32)
        o_ref[0] = (out + bo_ref[...]).astype(o_ref.dtype)          # lane-dense store


def attention(q4, kv4, bias, wo_hd, bo_row, *, tq=256, tkv=256):
    """q4: (B, H, N, D); kv4: (B, 2H, M, D) (K heads then V heads);
    bias: (B, 1, M) additive mask; wo_hd: (H, D, O); bo_row: (1, O).
    Returns (B, N, O) = softmax(q k^T + bias) v  projected by wo + bo."""
    B, H, N, D = q4.shape
    M = kv4.shape[2]
    O = wo_hd.shape[-1]
    tq = _pick_block(N, tq, 8)
    tkv = _pick_block(M, tkv, 128)
    grid = (B, N // tq, M // tkv)
    return pl.pallas_call(
        _attn_kernel,
        out_shape=jax.ShapeDtypeStruct((B, N, O), q4.dtype),
        grid_spec=pltpu.PrefetchScalarGridSpec(
            num_scalar_prefetch=0,
            grid=grid,
            in_specs=[
                pl.BlockSpec((1, H, tq, D), lambda b, n, kv: (b, 0, n, 0)),
                pl.BlockSpec((1, H, tkv, D), lambda b, n, kv: (b, 0, kv, 0)),  # K heads
                pl.BlockSpec((1, H, tkv, D), lambda b, n, kv: (b, 1, kv, 0)),  # V heads
                pl.BlockSpec((1, 1, tkv), lambda b, n, kv: (b, 0, kv)),
                pl.BlockSpec((H, D, O), lambda b, n, kv: (0, 0, 0)),
                pl.BlockSpec((1, O), lambda b, n, kv: (0, 0)),
            ],
            out_specs=pl.BlockSpec((1, tq, O), lambda b, n, kv: (b, n, 0)),
            scratch_shapes=[
                pltpu.VMEM((H, tq, 1), jnp.float32),   # running max
                pltpu.VMEM((H, tq, 1), jnp.float32),   # running denominator
                pltpu.VMEM((H, tq, D), jnp.float32),   # running numerator
            ],
        ),
        compiler_params=pltpu.CompilerParams(
            dimension_semantics=("parallel", "parallel", "arbitrary"),
            vmem_limit_bytes=32 * 1024 * 1024,
        ),
    )(q4, kv4, kv4, bias, wo_hd, bo_row)


# ----------------------------- Module wrapper --------------------------------

class CrossAttention:
    def __init__(self, query_dim, context_dim=None, heads=8, dim_head=64,
                 dropout=0.0, key=None):
        inner_dim = dim_head * heads
        context_dim = query_dim if context_dim is None else context_dim
        self.scale = dim_head ** (-0.5)
        self.heads = heads
        self.dim_head = dim_head
        self.query_dim = query_dim

        key = jax.random.PRNGKey(42) if key is None else key
        k1, k2, k3, k4, k5 = jax.random.split(key, 5)
        init = lambda k, shape: 0.02 * jax.random.normal(k, shape, jnp.float32)
        # Raw PyTorch nn.Linear layouts (out_features, in_features) -- for the reference.
        self.wq = init(k1, (inner_dim, query_dim))     # to_q (no bias)
        self.wk = init(k2, (inner_dim, context_dim))   # to_k (no bias)
        self.wv = init(k3, (inner_dim, context_dim))   # to_v (no bias)
        self.wo = init(k4, (query_dim, inner_dim))     # to_out[0]
        self.bo = init(k5, (query_dim,))

        h, d = heads, dim_head

        def to_heads(w):   # (h*d, cin) -> (h, cin, d); one-time host rearrange
            return jnp.transpose(w.reshape(h, d, -1), (0, 2, 1))

        # Kernel-side layouts: pre-rearranged once, scale folded into q weights,
        # K/V fused into a single projection weight.
        self.wq_heads = to_heads(self.wq) * self.scale                   # (H, Cq, D)
        self.wkv_heads = jnp.concatenate(
            [to_heads(self.wk), to_heads(self.wv)], axis=0)              # (2H, Cc, D)
        self.wo_hd = self.wo.T.reshape(h, d, query_dim)                  # (H, D, O)
        self.bo_row = self.bo.reshape(1, query_dim)                      # (1, O)
        # TODO(synk): nn.Dropout(p=dropout) is the identity at p=0.0; not implemented.

    def __call__(self, x, context=None, mask=None):
        B, N, _ = x.shape
        text = x if context is None else context["states"]
        M = text.shape[1]

        # Projections straight into per-head layout (no wrapper transposes).
        q4 = proj_heads(x, self.wq_heads)        # (B, H, N, D)  (scale folded in)
        kv4 = proj_heads(text, self.wkv_heads)   # (B, 2H, M, D) K heads then V heads

        if context is not None:
            mask = context["mask"]
        neg = -jnp.finfo(jnp.float32).max
        if mask is None:
            bias = jnp.zeros((B, 1, M), jnp.float32)
        else:
            mb = mask.reshape(B, 1, -1).astype(bool)
            bias = jnp.where(mb, 0.0, neg).astype(jnp.float32)

        # Flash attention with fused output projection -> (B, N, query_dim).
        return attention(q4, kv4, bias, self.wo_hd, self.bo_row)


# ----------------------------- pure-JAX reference ----------------------------

def reference(x, context, module, mask=None):
    h, d = module.heads, module.dim_head
    B, N, _ = x.shape
    q = x @ module.wq.T
    text = x if context is None else context["states"]
    k = text @ module.wk.T
    v = text @ module.wv.T

    def split(t):
        b, n, _ = t.shape
        return t.reshape(b, n, h, d).transpose(0, 2, 1, 3).reshape(b * h, n, d)

    q, k, v = map(split, (q, k, v))
    sim = jnp.einsum("bid,bjd->bij", q, k) * module.scale
    if context is not None:
        mask = context["mask"]
    if mask is not None:
        m = mask.reshape(B, -1).astype(bool)
        m = jnp.repeat(m, h, axis=0)[:, None, :]          # 'b j -> (b h) () j'
        sim = jnp.where(m, sim, -jnp.finfo(sim.dtype).max)
    attn = jax.nn.softmax(sim, axis=-1)
    out = jnp.einsum("bij,bjd->bid", attn, v)
    out = out.reshape(B, h, N, d).transpose(0, 2, 1, 3).reshape(B, N, h * d)
    return out @ module.wo.T + module.bo


# ----------------------------------- main ------------------------------------

if __name__ == "__main__":
    B, N, M = 2, 16, 8
    query_dim, context_dim = 32, 32
    heads, dim_head = 4, 8

    key = jax.random.PRNGKey(0)
    kx, ks, kp = jax.random.split(key, 3)
    x = jax.random.normal(kx, (B, N, query_dim), jnp.float32)
    states = jax.random.normal(ks, (B, M, context_dim), jnp.float32)
    # variable-length context mask (boolean, per-batch)
    lengths = jnp.array([M, 5])
    mask = jnp.arange(M)[None, :] < lengths[:, None]            # (B, M) bool
    context = {"states": states, "mask": mask}

    attn = CrossAttention(query_dim, context_dim=context_dim,
                          heads=heads, dim_head=dim_head, key=kp)

    # cross-attention path (context dict with states + mask)
    out_cross = attn(x, context=context)
    jax.block_until_ready(out_cross)
    ref_cross = reference(x, context, attn)

    # self-attention path (context=None, no mask)
    out_self = attn(x, context=None)
    jax.block_until_ready(out_self)
    ref_self = reference(x, None, attn)

    assert out_cross.shape == (B, N, query_dim)
    assert jnp.allclose(out_cross, ref_cross, atol=1e-3, rtol=1e-3), (
        float(jnp.max(jnp.abs(out_cross - ref_cross))))
    assert jnp.allclose(out_self, ref_self, atol=1e-3, rtol=1e-3), (
        float(jnp.max(jnp.abs(out_self - ref_self))))
    print("KERNEL_OK")
</pallas_src>

<mosaic_0001>
module attributes {stable_mosaic.version = 11 : i64} {
  func.func @_proj_heads_kernel(%arg0: i32, %arg1: i32, %arg2: i32, %arg3: memref<1x16x32xf32, #tpu.memory_space<vmem>>, %arg4: memref<4x32x8xf32, #tpu.memory_space<vmem>>, %arg5: memref<1x4x16x8xf32, #tpu.memory_space<vmem>>, %arg6: memref<4x16x8xf32, #tpu.memory_space<vmem>>) attributes {dimension_semantics = [#tpu.dimension_semantics<parallel>, #tpu.dimension_semantics<parallel>, #tpu.dimension_semantics<arbitrary>], iteration_bounds = array<i64: 2, 1, 1>, scalar_prefetch = 0 : i64, scratch_operands = 1 : i64, tpu.core_type = #tpu.core_type<tc>, window_params = [{transform_indices = @transform_0, window_bounds = array<i64: 1, 16, 32>}, {transform_indices = @transform_1, window_bounds = array<i64: 4, 32, 8>}, {transform_indices = @transform_2, window_bounds = array<i64: 1, 4, 16, 8>}]} {
    %c0_i32 = arith.constant 0 : i32
    %0 = arith.cmpi eq, %arg2, %c0_i32 : i32
    %1 = arith.extui %0 : i1 to i32
    %c0_i32_0 = arith.constant 0 : i32
    %2 = arith.cmpi ne, %1, %c0_i32_0 : i32
    scf.if %2 {
      %cst_41 = arith.constant 0.000000e+00 : f32
      %44 = vector.broadcast %cst_41 : f32 to vector<4x16x8xf32>
      %c0_42 = arith.constant 0 : index
      %c0_43 = arith.constant 0 : index
      %c0_44 = arith.constant 0 : index
      %45 = vector.load %arg6[%c0_42, %c0_43, %c0_44] : memref<4x16x8xf32, #tpu.memory_space<vmem>>, vector<4x16x8xf32>
      tpu.vector_store %arg6[%c0_42, %c0_43, %c0_44], %44 {strides = array<i32>} : memref<4x16x8xf32, #tpu.memory_space<vmem>>, vector<4x16x8xf32>,
    } else {
    }
    %c0 = arith.constant 0 : index
    %c0_1 = arith.constant 0 : index
    %c0_2 = arith.constant 0 : index
    %3 = vector.load %arg3[%c0, %c0_1, %c0_2] : memref<1x16x32xf32, #tpu.memory_space<vmem>>, vector<1x16x32xf32>
    %4 = vector.shape_cast %3 : vector<1x16x32xf32> to vector<16x32xf32>
    %c0_3 = arith.constant 0 : index
    %c0_4 = arith.constant 0 : index
    %c0_5 = arith.constant 0 : index
    %5 = vector.load %arg6[%c0_3, %c0_4, %c0_5] : memref<4x16x8xf32, #tpu.memory_space<vmem>>, vector<1x16x8xf32>
    %6 = vector.shape_cast %5 : vector<1x16x8xf32> to vector<16x8xf32>
    %c0_6 = arith.constant 0 : index
    %c0_7 = arith.constant 0 : index
    %c0_8 = arith.constant 0 : index
    %7 = vector.load %arg4[%c0_6, %c0_7, %c0_8] : memref<4x32x8xf32, #tpu.memory_space<vmem>>, vector<1x32x8xf32>
    %8 = vector.shape_cast %7 : vector<1x32x8xf32> to vector<32x8xf32>
    %cst = arith.constant dense<0.000000e+00> : vector<16x8xf32>
    %9 = tpu.matmul %4, %8, %cst {dimension_numbers = #tpu.dot_dimension_numbers<[1], [0], [0], [1], [0, 0, 1, 1], [], []>} : vector<16x32xf32>, vector<32x8xf32>, vector<16x8xf32> -> vector<16x8xf32>
    %10 = arith.addf %6, %9 : vector<16x8xf32>
    %c0_9 = arith.constant 0 : index
    %c0_10 = arith.constant 0 : index
    %c0_11 = arith.constant 0 : index
    %11 = vector.load %arg6[%c0_9, %c0_10, %c0_11] : memref<4x16x8xf32, #tpu.memory_space<vmem>>, vector<1x16x8xf32>
    %12 = vector.shape_cast %11 : vector<1x16x8xf32> to vector<16x8xf32>
    %13 = vector.shape_cast %10 : vector<16x8xf32> to vector<1x16x8xf32>
    tpu.vector_store %arg6[%c0_9, %c0_10, %c0_11], %13 {strides = array<i32>} : memref<4x16x8xf32, #tpu.memory_space<vmem>>, vector<1x16x8xf32>,
    %c1 = arith.constant 1 : index
    %c0_12 = arith.constant 0 : index
    %c0_13 = arith.constant 0 : index
    %14 = vector.load %arg6[%c1, %c0_12, %c0_13] : memref<4x16x8xf32, #tpu.memory_space<vmem>>, vector<1x16x8xf32>
    %15 = vector.shape_cast %14 : vector<1x16x8xf32> to vector<16x8xf32>
    %c1_14 = arith.constant 1 : index
    %c0_15 = arith.constant 0 : index
    %c0_16 = arith.constant 0 : index
    %16 = vector.load %arg4[%c1_14, %c0_15, %c0_16] : memref<4x32x8xf32, #tpu.memory_space<vmem>>, vector<1x32x8xf32>
    %17 = vector.shape_cast %16 : vector<1x32x8xf32> to vector<32x8xf32>
    %cst_17 = arith.constant dense<0.000000e+00> : vector<16x8xf32>
    %18 = tpu.matmul %4, %17, %cst_17 {dimension_numbers = #tpu.dot_dimension_numbers<[1], [0], [0], [1], [0, 0, 1, 1], [], []>} : vector<16x32xf32>, vector<32x8xf32>, vector<16x8xf32> -> vector<16x8xf32>
    %19 = arith.addf %15, %18 : vector<16x8xf32>
    %c1_18 = arith.constant 1 : index
    %c0_19 = arith.constant 0 : index
    %c0_20 = arith.constant 0 : index
    %20 = vector.load %arg6[%c1_18, %c0_19, %c0_20] : memref<4x16x8xf32, #tpu.memory_space<vmem>>, vector<1x16x8xf32>
    %21 = vector.shape_cast %20 : vector<1x16x8xf32> to vector<16x8xf32>
    %22 = vector.shape_cast %19 : vector<16x8xf32> to vector<1x16x8xf32>
    tpu.vector_store %arg6[%c1_18, %c0_19, %c0_20], %22 {strides = array<i32>} : memref<4x16x8xf32, #tpu.memory_space<vmem>>, vector<1x16x8xf32>,
    %c2 = arith.constant 2 : index
    %c0_21 = arith.constant 0 : index
    %c0_22 = arith.constant 0 : index
    %23 = vector.load %arg6[%c2, %c0_21, %c0_22] : memref<4x16x8xf32, #tpu.memory_space<vmem>>, vector<1x16x8xf32>
    %24 = vector.shape_cast %23 : vector<1x16x8xf32> to vector<16x8xf32>
    %c2_23 = arith.constant 2 : index
    %c0_24 = arith.constant 0 : index
    %c0_25 = arith.constant 0 : index
    %25 = vector.load %arg4[%c2_23, %c0_24, %c0_25] : memref<4x32x8xf32, #tpu.memory_space<vmem>>, vector<1x32x8xf32>
    %26 = vector.shape_cast %25 : vector<1x32x8xf32> to vector<32x8xf32>
    %cst_26 = arith.constant dense<0.000000e+00> : vector<16x8xf32>
    %27 = tpu.matmul %4, %26, %cst_26 {dimension_numbers = #tpu.dot_dimension_numbers<[1], [0], [0], [1], [0, 0, 1, 1], [], []>} : vector<16x32xf32>, vector<32x8xf32>, vector<16x8xf32> -> vector<16x8xf32>
    %28 = arith.addf %24, %27 : vector<16x8xf32>
    %c2_27 = arith.constant 2 : index
    %c0_28 = arith.constant 0 : index
    %c0_29 = arith.constant 0 : index
    %29 = vector.load %arg6[%c2_27, %c0_28, %c0_29] : memref<4x16x8xf32, #tpu.memory_space<vmem>>, vector<1x16x8xf32>
    %30 = vector.shape_cast %29 : vector<1x16x8xf32> to vector<16x8xf32>
    %31 = vector.shape_cast %28 : vector<16x8xf32> to vector<1x16x8xf32>
    tpu.vector_store %arg6[%c2_27, %c0_28, %c0_29], %31 {strides = array<i32>} : memref<4x16x8xf32, #tpu.memory_space<vmem>>, vector<1x16x8xf32>,
    %c3 = arith.constant 3 : index
    %c0_30 = arith.constant 0 : index
    %c0_31 = arith.constant 0 : index
    %32 = vector.load %arg6[%c3, %c0_30, %c0_31] : memref<4x16x8xf32, #tpu.memory_space<vmem>>, vector<1x16x8xf32>
    %33 = vector.shape_cast %32 : vector<1x16x8xf32> to vector<16x8xf32>
    %c3_32 = arith.constant 3 : index
    %c0_33 = arith.constant 0 : index
    %c0_34 = arith.constant 0 : index
    %34 = vector.load %arg4[%c3_32, %c0_33, %c0_34] : memref<4x32x8xf32, #tpu.memory_space<vmem>>, vector<1x32x8xf32>
    %35 = vector.shape_cast %34 : vector<1x32x8xf32> to vector<32x8xf32>
    %cst_35 = arith.constant dense<0.000000e+00> : vector<16x8xf32>
    %36 = tpu.matmul %4, %35, %cst_35 {dimension_numbers = #tpu.dot_dimension_numbers<[1], [0], [0], [1], [0, 0, 1, 1], [], []>} : vector<16x32xf32>, vector<32x8xf32>, vector<16x8xf32> -> vector<16x8xf32>
    %37 = arith.addf %33, %36 : vector<16x8xf32>
    %c3_36 = arith.constant 3 : index
    %c0_37 = arith.constant 0 : index
    %c0_38 = arith.constant 0 : index
    %38 = vector.load %arg6[%c3_36, %c0_37, %c0_38] : memref<4x16x8xf32, #tpu.memory_space<vmem>>, vector<1x16x8xf32>
    %39 = vector.shape_cast %38 : vector<1x16x8xf32> to vector<16x8xf32>
    %40 = vector.shape_cast %37 : vector<16x8xf32> to vector<1x16x8xf32>
    tpu.vector_store %arg6[%c3_36, %c0_37, %c0_38], %40 {strides = array<i32>} : memref<4x16x8xf32, #tpu.memory_space<vmem>>, vector<1x16x8xf32>,
    %c0_i32_39 = arith.constant 0 : i32
    %41 = arith.cmpi eq, %arg2, %c0_i32_39 : i32
    %42 = arith.extui %41 : i1 to i32
    %c0_i32_40 = arith.constant 0 : i32
    %43 = arith.cmpi ne, %42, %c0_i32_40 : i32
    scf.if %43 {
      %c0_41 = arith.constant 0 : index
      %c0_42 = arith.constant 0 : index
      %c0_43 = arith.constant 0 : index
      %44 = vector.load %arg6[%c0_41, %c0_42, %c0_43] : memref<4x16x8xf32, #tpu.memory_space<vmem>>, vector<4x16x8xf32>
      %c0_44 = arith.constant 0 : index
      %c0_45 = arith.constant 0 : index
      %c0_46 = arith.constant 0 : index
      %c0_47 = arith.constant 0 : index
      %45 = vector.load %arg5[%c0_44, %c0_45, %c0_46, %c0_47] : memref<1x4x16x8xf32, #tpu.memory_space<vmem>>, vector<1x4x16x8xf32>
      %46 = vector.shape_cast %45 : vector<1x4x16x8xf32> to vector<4x16x8xf32>
      %47 = vector.shape_cast %44 : vector<4x16x8xf32> to vector<1x4x16x8xf32>
      tpu.vector_store %arg5[%c0_44, %c0_45, %c0_46, %c0_47], %47 {strides = array<i32>} : memref<1x4x16x8xf32, #tpu.memory_space<vmem>>, vector<1x4x16x8xf32>,
    } else {
    }
    return
  }
  func.func @transform_0(%arg0: i32, %arg1: i32, %arg2: i32) -> (i32, i32, i32) {
    %c0_i32 = arith.constant 0 : i32
    return %arg0, %arg1, %arg2 : i32, i32, i32
  }
  func.func @transform_1(%arg0: i32, %arg1: i32, %arg2: i32) -> (i32, i32, i32) {
    %c0_i32 = arith.constant 0 : i32
    %c0_i32_0 = arith.constant 0 : i32
    %c0_i32_1 = arith.constant 0 : i32
    return %c0_i32, %arg2, %c0_i32_0 : i32, i32, i32
  }
  func.func @transform_2(%arg0: i32, %arg1: i32, %arg2: i32) -> (i32, i32, i32, i32) {
    %c0_i32 = arith.constant 0 : i32
    %c0_i32_0 = arith.constant 0 : i32
    %c0_i32_1 = arith.constant 0 : i32
    return %arg0, %c0_i32, %arg1, %c0_i32_0 : i32, i32, i32, i32
  }
}

</mosaic_0001>

<llo_original>
// kernel: tpu_custom_call.1
$region0: #{tpu_custom_call.1}
  #allocation0 [shape = 'u32[]', space=smem, size = 0x4, offset = 0x4, fixed_abs, tag = 'smem constant byte address 0x4 - core index']
  #allocation1 [shape = 'u32[144,128]{1,0:T(1,128)}', space=vmem, size = 0x12000, scoped, tag = 'internal scratch']
  #allocation2 [shape = 'f32[4,16,8]{2,1,0:T(8,128)}', space=vmem, size = 0x8000, scoped, tag = 'scratch operand']
  %s0 = inlined_call_operand.vmem [shape: f32[2,16,32], index: 0, kind: input, shape index: {}]
  %s1 = inlined_call_operand.vmem [shape: f32[4,32,8], index: 1, kind: input, shape index: {}]
  %s2 = inlined_call_operand.vmem [shape: f32[2,4,16,8], index: 2, kind: output, shape index: {}]
  %s3 = sld [smem:[#allocation0]]
  $region49: #{tpu_custom_call.1} parent=0
    _
  %s5 = ssub.s32 1, %s3
  %s6 = scalar_select 0, %s5, %s3
  loop: start=0, step=1, limit=4
  $region2: #{tpu_custom_call.1} parent=0 // loop_pre_header
    _
  $region3: #{tpu_custom_call.1} parent=0 // loop_header
    %s8 = sphi 0, %s12
    %p9 = scmp.ge.s32.totalorder %s8, 4
    %s15 = sphi 0, %s34
    %s16 = sphi 0, %s30
    %s17 = sphi 0, %s26
    %s18 = sphi 0, %s15
    %s19 = sphi 0, %s16
    %s20 = sphi 0, %s17
    %s21 = sphi 0, %s18
    %s22 = sphi 0, %s19
    %s23 = sphi 0, %s20
    %s41 = sphi 0, %s43
    %s44 = sphi 0, %s41
    %s45 = sphi 0, %s44
    %s61 = sphi 0, %s45
    %s67 = sphi 0, %s69
    %s70 = sphi 0, %s67
    %s71 = sphi 0, %s70
    %s87 = sphi 0, %s71
    %s95 = sphi 0, %s97
    %s98 = sphi 0, %s95
    %s99 = sphi 0, %s98
    %s115 = sphi 0, %s99
  $region4: #{tpu_custom_call.1} parent=0 // loop_header_branch
    %11 = sbr.rel (%p9) target = $region8
  $region5: #{tpu_custom_call.1} parent=0 // loop_body
    %s13 = ssub.s32 %s8, 1
    %s14 = ssub.s32 %s8, 2
    %s24 = sadd.s32 1, %s17
    %p25 = scmp.ge.s32.totalorder %s24, 1
    %s26 = scalar_select %p25, 0, %s24
    %s27 = sadd.s32 1, %s16
    %s28 = scalar_select %p25, %s27, %s16
    %p29 = scmp.ge.s32.totalorder %s28, 1
    %s30 = scalar_select %p29, 0, %s28
    %s31 = sadd.s32 1, %s15
    %s32 = scalar_select %p29, %s31, %s15
    %p33 = scmp.ge.s32.totalorder %s32, 2
    %s34 = scalar_select %p33, 0, %s32
    %s35 = ssub.s32 %s15, %s34
    %s36 = ssub.s32 %s16, %s30
    %s37 = sor.u32 %s35, %s36
    %s38 = ssub.s32 %s17, %s26
    %s39 = sor.u32 %s37, %s38
    %p40 = scmp.eq.s32.totalorder %s39, 0
    %s42 = sadd.s32 %s41, 1
    %s43 = scalar_select %p40, %s41, %s42
    %p46 = pneg %p40
    %p47 = scmp.eq.s32.totalorder %s8, 1
    %p48 = por %p46, %p47
    %p49 = scmp.ne.s32.totalorder %s41, %s44
    %p50 = scmp.eq.s32.totalorder %s8, 0
    %p51 = por %p49, %p50
    %p52 = scmp.ne.s32.totalorder %s41, %s44
    %p53 = scmp.eq.s32.totalorder %s13, 1
    %p54 = por %p52, %p53
    %p55 = scmp.ne.s32.totalorder %s44, %s45
    %p56 = scmp.eq.s32.totalorder %s13, 0
    %p57 = por %p55, %p56
    %p58 = scmp.ne.s32.totalorder %s44, %s45
    %p59 = scmp.eq.s32.totalorder %s14, 1
    %p60 = por %p58, %p59
    %p62 = scmp.ne.s32.totalorder %s45, %s61
    %p63 = scmp.eq.s32.totalorder %s14, 0
    %p64 = por %p62, %p63
    %s65 = ssub.s32 %s17, %s26
    %p66 = scmp.eq.s32.totalorder %s65, 0
    %s68 = sadd.s32 %s67, 1
    %s69 = scalar_select %p66, %s67, %s68
    %p72 = pneg %p66
    %p73 = scmp.eq.s32.totalorder %s8, 1
    %p74 = por %p72, %p73
    %p75 = scmp.ne.s32.totalorder %s67, %s70
    %p76 = scmp.eq.s32.totalorder %s8, 0
    %p77 = por %p75, %p76
    %p78 = scmp.ne.s32.totalorder %s67, %s70
    %p79 = scmp.eq.s32.totalorder %s13, 1
    %p80 = por %p78, %p79
    %p81 = scmp.ne.s32.totalorder %s70, %s71
    %p82 = scmp.eq.s32.totalorder %s13, 0
    %p83 = por %p81, %p82
    %p84 = scmp.ne.s32.totalorder %s70, %s71
    %p85 = scmp.eq.s32.totalorder %s14, 1
    %p86 = por %p84, %p85
    %p88 = scmp.ne.s32.totalorder %s71, %s87
    %p89 = scmp.eq.s32.totalorder %s14, 0
    %p90 = por %p88, %p89
    %s91 = ssub.s32 %s15, %s34
    %s92 = ssub.s32 %s16, %s30
    %s93 = sor.u32 %s91, %s92
    %p94 = scmp.eq.s32.totalorder %s93, 0
    %s96 = sadd.s32 %s95, 1
    %s97 = scalar_select %p94, %s95, %s96
    %p100 = pneg %p94
    %p101 = scmp.eq.s32.totalorder %s8, 1
    %p102 = por %p100, %p101
    %p103 = scmp.ne.s32.totalorder %s95, %s98
    %p104 = scmp.eq.s32.totalorder %s8, 0
    %p105 = por %p103, %p104
    %p106 = scmp.ne.s32.totalorder %s95, %s98
    %p107 = scmp.eq.s32.totalorder %s13, 1
    %p108 = por %p106, %p107
    %p109 = scmp.ne.s32.totalorder %s98, %s99
    %p110 = scmp.eq.s32.totalorder %s13, 0
    %p111 = por %p109, %p110
    %p112 = scmp.ne.s32.totalorder %s98, %s99
    %p113 = scmp.eq.s32.totalorder %s14, 1
    %p114 = por %p112, %p113
    %p116 = scmp.ne.s32.totalorder %s99, %s115
    %p117 = scmp.eq.s32.totalorder %s14, 0
    %p118 = por %p116, %p117
    %p119 = scmp.le.s32.totalorder 1, %s8
    %p120 = scmp.lt.s32.totalorder %s8, 3
    %p121 = pnand %p119, %p120
    %p122 = pneg %p121
    // Predicated region
    $region9: #{tpu_custom_call.1} parent=5 // pred_check
      _
    $region10: #{tpu_custom_call.1} parent=5 // pred_check_branch
      %124 = sbr.rel (%p121) target = $region12
    $region11: #{tpu_custom_call.1} parent=5 // pred_region
      %s125 = ssub.s32 %s8, 1
      // Predicated region
      $region13: #{tpu_custom_call.1} parent=11 // pred_check
        %p126 = pneg %p83
      $region14: #{tpu_custom_call.1} parent=11 // pred_check_branch
        %128 = sbr.rel (%p126) target = $region16
      $region15: #{tpu_custom_call.1} parent=11 // pred_region
        %s129 = smul.u32 4, %s20
        %p130 = scmp.lt.s32.totalorder %s129, 3
        %s131 = scalar_select %p130, %s129, 3
        %s132 = smul.addr %s131, 8
        %s133 = scalar_lea.vmem %s1, %s132
        %s134 = smul.u32 4, %s20
      $region16: #{tpu_custom_call.1} parent=11 // pred_fallthru
        _
    $region12: #{tpu_custom_call.1} parent=5 // pred_fallthru
      _
    %p135 = scmp.lt.s32.totalorder %s8, 2
    // Predicated region
    $region17: #{tpu_custom_call.1} parent=5 // pred_check
      %p136 = pneg %p135
    $region18: #{tpu_custom_call.1} parent=5 // pred_check_branch
      %138 = sbr.rel (%p136) target = $region20
    $region19: #{tpu_custom_call.1} parent=5 // pred_region
      // Predicated region
      $region21: #{tpu_custom_call.1} parent=19 // pred_check
        %p139 = pneg %p51
      $region22: #{tpu_custom_call.1} parent=19 // pred_check_branch
        %141 = sbr.rel (%p139) target = $region24
      $region23: #{tpu_custom_call.1} parent=19 // pred_region
        %s142 = smul.u32 2, %s16
        %p143 = scmp.lt.s32.totalorder %s15, 1
        %s144 = scalar_select %p143, %s15, 1
        %p145 = scmp.lt.s32.totalorder %s142, 1
        %s146 = scalar_select %p145, %s142, 1
        %p147 = scmp.lt.s32.totalorder %s17, 0
        %s148 = scalar_select %p147, %s17, 0
        %s149 = sadd.s32 %s148, %s146
        %s150 = smul.addr %s144, 2
        %s151 = sadd.s32 %s149, %s150
        %s152 = smul.addr %s151, 8
        %s153 = scalar_lea.vmem %s0, %s152
        %s154 = smul.u32 2, %s16
      $region24: #{tpu_custom_call.1} parent=19 // pred_fallthru
        _
    $region20: #{tpu_custom_call.1} parent=5 // pred_fallthru
      _
    %p155 = scmp.le.s32.totalorder 1, %s8
    %p156 = scmp.lt.s32.totalorder %s8, 3
    %p157 = pnand %p155, %p156
    %p158 = pneg %p157
    // Predicated region
    $region25: #{tpu_custom_call.1} parent=5 // pred_check
      _
    $region26: #{tpu_custom_call.1} parent=5 // pred_check_branch
      %160 = sbr.rel (%p157) target = $region28
    $region27: #{tpu_custom_call.1} parent=5 // pred_region
      %s161 = ssub.s32 %s8, 1
      %s162 = smul.u32 2, %s19
      %p163 = scmp.lt.s32.totalorder %s18, 1
      %s164 = scalar_select %p163, %s18, 1
      %p165 = scmp.lt.s32.totalorder %s162, 1
      %s166 = scalar_select %p165, %s162, 1
      %p167 = scmp.lt.s32.totalorder %s20, 0
      %s168 = scalar_select %p167, %s20, 0
      %s169 = sadd.s32 %s168, %s166
      %s170 = smul.addr %s164, 2
      %s171 = sadd.s32 %s169, %s170
      %s172 = smul.addr %s171, 8
      %s173 = scalar_lea.vmem %s0, %s172
      %p174 = pneg %p57
      %p175 = pneg %p54
      %s176 = smul.u32 4, %s20
      %p177 = scmp.lt.s32.totalorder %s176, 3
      %s178 = scalar_select %p177, %s176, 3
      %s179 = smul.addr %s178, 8
      %s180 = scalar_lea.vmem %s1, %s179
      %p181 = pneg %p83
      %p182 = pneg %p80
      %p183 = pneg %p111
      %p184 = pneg %p108
      %s185 = smul.u32 2, %s19
      %p186 = scmp.lt.s32.totalorder %s18, 1
      %s187 = scalar_select %p186, %s18, 1
      %p188 = scmp.lt.s32.totalorder %s185, 1
      %s189 = scalar_select %p188, %s185, 1
      %s190 = smul.addr %s187, 8
      %s191 = sadd.s32 %s189, %s190
      %s192 = smul.addr %s191, 8
      %s193 = scalar_lea.vmem %s2, %s192
      %s194 = smul.u32 2, %s19
      %p195 = scmp.lt.s32.totalorder %s18, 1
      %s196 = scalar_select %p195, %s18, 1
      %p197 = scmp.lt.s32.totalorder %s194, 1
      %s198 = scalar_select %p197, %s194, 1
      %p199 = scmp.lt.s32.totalorder %s20, 0
      %s200 = scalar_select %p199, %s20, 0
      %s201 = sadd.s32 %s200, %s198
      %s202 = smul.addr %s196, 2
      %s203 = sadd.s32 %s201, %s202
      %s204 = smul.addr %s203, 8
      %s205 = scalar_lea.vmem %s0, %s204
      %s206 = smul.u32 2, %s19
      %s207 = smul.u32 4, %s20
      %p208 = scmp.lt.s32.totalorder %s207, 3
      %s209 = scalar_select %p208, %s207, 3
      %s210 = smul.addr %s209, 8
      %s211 = scalar_lea.vmem %s1, %s210
      %s212 = smul.u32 4, %s20
      %s213 = smul.u32 2, %s19
      %p214 = scmp.lt.s32.totalorder %s18, 1
      %s215 = scalar_select %p214, %s18, 1
      %p216 = scmp.lt.s32.totalorder %s213, 1
      %s217 = scalar_select %p216, %s213, 1
      %s218 = smul.addr %s215, 8
      %s219 = sadd.s32 %s217, %s218
      %s220 = smul.addr %s219, 8
      %s221 = scalar_lea.vmem %s2, %s220
      %s222 = smul.u32 2, %s19
      %p223 = scmp.eq.s32.totalorder %s20, 0
      // Predicated region
      $region29: #{tpu_custom_call.1} parent=27 // pred_check
        %p224 = pneg %p223
      $region30: #{tpu_custom_call.1} parent=27 // pred_check_branch
        %226 = sbr.rel (%p224) target = $region32
      $region31: #{tpu_custom_call.1} parent=27 // pred_region
        %vm227 = vcmask 64512
        %228 = vst.msk [vmem:[#allocation2] sm:$0xff] %vm227, 0.0
        %229 = vst.msk [vmem:[#allocation2 + $0x8] sm:$0xff] %vm227, 0.0
        %230 = vst.msk [vmem:[#allocation2 + $0x10] sm:$0xff] %vm227, 0.0
        %231 = vst.msk [vmem:[#allocation2 + $0x18] sm:$0xff] %vm227, 0.0
        %232 = vst.msk [vmem:[#allocation2 + $0x20] sm:$0xff] %vm227, 0.0
        %233 = vst.msk [vmem:[#allocation2 + $0x28] sm:$0xff] %vm227, 0.0
        %234 = vst.msk [vmem:[#allocation2 + $0x30] sm:$0xff] %vm227, 0.0
        %235 = vst.msk [vmem:[#allocation2 + $0x38] sm:$0xff] %vm227, 0.0
      $region32: #{tpu_custom_call.1} parent=27 // pred_fallthru
        _
      %v236 = vld [vmem:[%s205] sm:$0xff]
      %v237 = vld [vmem:[%s205 + $0x8] sm:$0xff]
      %v238 = vld [vmem:[#allocation2] sm:$0xff]
      %v239 = vld [vmem:[#allocation2 + $0x8] sm:$0xff]
      %v240 = vld [vmem:[%s211] sm:$0xff]
      %v241 = vld [vmem:[%s211 + $0x8] sm:$0xff]
      %v242 = vld [vmem:[%s211 + $0x10] sm:$0xff]
      %v243 = vld [vmem:[%s211 + $0x18] sm:$0xff]
      %vm244 = vcmask 261120
      %v246 = vsel %vm244, %v236, 0
      %v249 = vsel %vm244, %v237, 0
      %251 = vmatprep.subr.mxu0 0.0
      %252 = vmatpush1.msra.mxu0 %v240
      %253 = vmatprep.subr.mxu0 0.0
      %254 = vmatpush1.msra.mxu0 %v241
      %255 = vmatprep.subr.mxu0 0.0
      %256 = vmatpush1.msra.mxu0 %v242
      %257 = vmatprep.subr.mxu0 0.0
      %258 = vmatpush1.msra.mxu0 %v243
      %259 = vmatprep.subr.mxu0 0.0
      %260 = vmatpush1.msra.mxu0 0.0
      %261 = vmatprep.subr.mxu0 0.0
      %262 = vmatpush1.msra.mxu0 0.0
      %263 = vmatprep.subr.mxu0 0.0
      %264 = vmatpush1.msra.mxu0 0.0
      %265 = vmatprep.subr.mxu0 0.0
      %266 = vmatpush1.msra.mxu0 0.0
      %267 = vmatprep.subr.mxu0 0.0
      %268 = vmatpush1.msra.mxu0 0.0
      %269 = vmatprep.subr.mxu0 0.0
      %270 = vmatpush1.msra.mxu0 0.0
      %271 = vmatprep.subr.mxu0 0.0
      %272 = vmatpush1.msra.mxu0 0.0
      %273 = vmatprep.subr.mxu0 0.0
      %274 = vmatpush1.msra.mxu0 0.0
      %275 = vmatprep.subr.mxu0 0.0
      %276 = vmatpush1.msra.mxu0 0.0
      %277 = vmatprep.subr.mxu0 0.0
      %278 = vmatpush1.msra.mxu0 0.0
      %279 = vmatprep.subr.mxu0 0.0
      %280 = vmatpush1.msra.mxu0 0.0
      %281 = vmatprep.subr.mxu0 0.0
      %282 = vmatpush1.msra.mxu0 0.0
      %283 = vmatprep.subr.mxu0 0.0
      %284 = vmatpush1.msra.mxu0 0.0
      %285 = vmatprep.subr.mxu0 0.0
      %286 = vmatpush1.msra.mxu0 0.0
      %287 = vmatprep.subr.mxu0 0.0
      %288 = vmatpush1.msra.mxu0 0.0
      %289 = vmatprep.subr.mxu0 0.0
      %290 = vmatpush1.msra.mxu0 0.0
      %291 = vmatprep.subr.mxu0 0.0
      %292 = vmatpush1.msra.mxu0 0.0
      %293 = vmatprep.subr.mxu0 0.0
      %294 = vmatpush1.msra.mxu0 0.0
      %295 = vmatprep.subr.mxu0 0.0
      %296 = vmatpush1.msra.mxu0 0.0
      %297 = vmatprep.subr.mxu0 0.0
      %298 = vmatpush1.msra.mxu0 0.0
      %299 = vmatprep.subr.mxu0 0.0
      %300 = vmatpush1.msra.mxu0 0.0
      %301 = vmatprep.subr.mxu0 0.0
      %302 = vmatpush1.msra.mxu0 0.0
      %303 = vmatprep.subr.mxu0 0.0
      %304 = vmatpush1.msra.mxu0 0.0
      %305 = vmatprep.subr.mxu0 0.0
      %306 = vmatpush1.msra.mxu0 0.0
      %307 = vmatprep.subr.mxu0 0.0
      %308 = vmatpush1.msra.mxu0 0.0
      %309 = vmatprep.subr.mxu0 0.0
      %310 = vmatpush1.msra.mxu0 0.0
      %311 = vmatprep.subr.mxu0 0.0
      %312 = vmatpush1.msra.mxu0 0.0
      %313 = vmatprep.subr.mxu0 0.0
      %314 = vmatpush1.msra.mxu0 0.0
      %315 = vmatprep.mubr.f32.mxu0 0.0
      %316 = vmatmul.mubr.f32.gmra.mrb[0].mxu0 %v246
      %v317 = vpop.f32.mrb[0].mxu0
      %v318 = vadd.f32 0.0, %v317
      %v319 = vpop.f32.mrb[0].mxu0
      %320 = vmatprep.mubr.f32.mxu0 0.0
      %321 = vmatmul.mubr.f32.gmra.mrb[0].mxu0 %v249
      %v322 = vpop.f32.mrb[0].mxu0
      %v323 = vadd.f32 0.0, %v322
      %v324 = vpop.f32.mrb[0].mxu0
      %325 = vdwg.mxu0
      %v326 = vadd.f32 %v238, %v318
      %v327 = vadd.f32 %v239, %v323
      %vm328 = vcmask 64512
      %329 = vst.msk [vmem:[#allocation2] sm:$0xff] %vm328, %v326
      %330 = vst.msk [vmem:[#allocation2 + $0x8] sm:$0xff] %vm328, %v327
      %s331 = scalar_lea.vmem [#allocation2], 16
      %v332 = vld [vmem:[%s331] sm:$0xff]
      %v333 = vld [vmem:[%s331 + $0x8] sm:$0xff]
      %s334 = scalar_lea.vmem %s211, 32
      %v335 = vld [vmem:[%s334] sm:$0xff]
      %v336 = vld [vmem:[%s334 + $0x8] sm:$0xff]
      %v337 = vld [vmem:[%s334 + $0x10] sm:$0xff]
      %v338 = vld [vmem:[%s334 + $0x18] sm:$0xff]
      %339 = vmatprep.subr.mxu0 0.0
      %340 = vmatpush1.msra.mxu0 %v335
      %341 = vmatprep.subr.mxu0 0.0
      %342 = vmatpush1.msra.mxu0 %v336
      %343 = vmatprep.subr.mxu0 0.0
      %344 = vmatpush1.msra.mxu0 %v337
      %345 = vmatprep.subr.mxu0 0.0
      %346 = vmatpush1.msra.mxu0 %v338
      %347 = vmatprep.subr.mxu0 0.0
      %348 = vmatpush1.msra.mxu0 0.0
      %349 = vmatprep.subr.mxu0 0.0
      %350 = vmatpush1.msra.mxu0 0.0
      %351 = vmatprep.subr.mxu0 0.0
      %352 = vmatpush1.msra.mxu0 0.0
      %353 = vmatprep.subr.mxu0 0.0
      %354 = vmatpush1.msra.mxu0 0.0
      %355 = vmatprep.subr.mxu0 0.0
      %356 = vmatpush1.msra.mxu0 0.0
      %357 = vmatprep.subr.mxu0 0.0
      %358 = vmatpush1.msra.mxu0 0.0
      %359 = vmatprep.subr.mxu0 0.0
      %360 = vmatpush1.msra.mxu0 0.0
      %361 = vmatprep.subr.mxu0 0.0
      %362 = vmatpush1.msra.mxu0 0.0
      %363 = vmatprep.subr.mxu0 0.0
      %364 = vmatpush1.msra.mxu0 0.0
      %365 = vmatprep.subr.mxu0 0.0
      %366 = vmatpush1.msra.mxu0 0.0
      %367 = vmatprep.subr.mxu0 0.0
      %368 = vmatpush1.msra.mxu0 0.0
      %369 = vmatprep.subr.mxu0 0.0
      %370 = vmatpush1.msra.mxu0 0.0
      %371 = vmatprep.subr.mxu0 0.0
      %372 = vmatpush1.msra.mxu0 0.0
      %373 = vmatprep.subr.mxu0 0.0
      %374 = vmatpush1.msra.mxu0 0.0
      %375 = vmatprep.subr.mxu0 0.0
      %376 = vmatpush1.msra.mxu0 0.0
      %377 = vmatprep.subr.mxu0 0.0
      %378 = vmatpush1.msra.mxu0 0.0
      %379 = vmatprep.subr.mxu0 0.0
      %380 = vmatpush1.msra.mxu0 0.0
      %381 = vmatprep.subr.mxu0 0.0
      %382 = vmatpush1.msra.mxu0 0.0
      %383 = vmatprep.subr.mxu0 0.0
      %384 = vmatpush1.msra.mxu0 0.0
      %385 = vmatprep.subr.mxu0 0.0
      %386 = vmatpush1.msra.mxu0 0.0
      %387 = vmatprep.subr.mxu0 0.0
      %388 = vmatpush1.msra.mxu0 0.0
      %389 = vmatprep.subr.mxu0 0.0
      %390 = vmatpush1.msra.mxu0 0.0
      %391 = vmatprep.subr.mxu0 0.0
      %392 = vmatpush1.msra.mxu0 0.0
      %393 = vmatprep.subr.mxu0 0.0
      %394 = vmatpush1.msra.mxu0 0.0
      %395 = vmatprep.subr.mxu0 0.0
      %396 = vmatpush1.msra.mxu0 0.0
      %397 = vmatprep.subr.mxu0 0.0
      %398 = vmatpush1.msra.mxu0 0.0
      %399 = vmatprep.subr.mxu0 0.0
      %400 = vmatpush1.msra.mxu0 0.0
      %401 = vmatprep.subr.mxu0 0.0
      %402 = vmatpush1.msra.mxu0 0.0
      %403 = vmatprep.mubr.f32.mxu0 0.0
      %404 = vmatmul.mubr.f32.gmra.mrb[0].mxu0 %v246
      %v405 = vpop.f32.mrb[0].mxu0
      %v406 = vadd.f32 0.0, %v405
      %v407 = vpop.f32.mrb[0].mxu0
      %408 = vmatprep.mubr.f32.mxu0 0.0
      %409 = vmatmul.mubr.f32.gmra.mrb[0].mxu0 %v249
      %v410 = vpop.f32.mrb[0].mxu0
      %v411 = vadd.f32 0.0, %v410
      %v412 = vpop.f32.mrb[0].mxu0
      %413 = vdwg.mxu0
      %v414 = vadd.f32 %v332, %v406
      %v415 = vadd.f32 %v333, %v411
      %416 = vst.msk [vmem:[%s331] sm:$0xff] %vm328, %v414
      %417 = vst.msk [vmem:[%s331 + $0x8] sm:$0xff] %vm328, %v415
      %s418 = scalar_lea.vmem [#allocation2], 32
      %v419 = vld [vmem:[%s418] sm:$0xff]
      %v420 = vld [vmem:[%s418 + $0x8] sm:$0xff]
      %s421 = scalar_lea.vmem %s211, 64
      %v422 = vld [vmem:[%s421] sm:$0xff]
      %v423 = vld [vmem:[%s421 + $0x8] sm:$0xff]
      %v424 = vld [vmem:[%s421 + $0x10] sm:$0xff]
      %v425 = vld [vmem:[%s421 + $0x18] sm:$0xff]
      %426 = vmatprep.subr.mxu0 0.0
      %427 = vmatpush1.msra.mxu0 %v422
      %428 = vmatprep.subr.mxu0 0.0
      %429 = vmatpush1.msra.mxu0 %v423
      %430 = vmatprep.subr.mxu0 0.0
      %431 = vmatpush1.msra.mxu0 %v424
      %432 = vmatprep.subr.mxu0 0.0
      %433 = vmatpush1.msra.mxu0 %v425
      %434 = vmatprep.subr.mxu0 0.0
      %435 = vmatpush1.msra.mxu0 0.0
      %436 = vmatprep.subr.mxu0 0.0
      %437 = vmatpush1.msra.mxu0 0.0
      %438 = vmatprep.subr.mxu0 0.0
      %439 = vmatpush1.msra.mxu0 0.0
      %440 = vmatprep.subr.mxu0 0.0
      %441 = vmatpush1.msra.mxu0 0.0
      %442 = vmatprep.subr.mxu0 0.0
      %443 = vmatpush1.msra.mxu0 0.0
      %444 = vmatprep.subr.mxu0 0.0
      %445 = vmatpush1.msra.mxu0 0.0
      %446 = vmatprep.subr.mxu0 0.0
      %447 = vmatpush1.msra.mxu0 0.0
      %448 = vmatprep.subr.mxu0 0.0
      %449 = vmatpush1.msra.mxu0 0.0
      %450 = vmatprep.subr.mxu0 0.0
      %451 = vmatpush1.msra.mxu0 0.0
      %452 = vmatprep.subr.mxu0 0.0
      %453 = vmatpush1.msra.mxu0 0.0
      %454 = vmatprep.subr.mxu0 0.0
      %455 = vmatpush1.msra.mxu0 0.0
      %456 = vmatprep.subr.mxu0 0.0
      %457 = vmatpush1.msra.mxu0 0.0
      %458 = vmatprep.subr.mxu0 0.0
      %459 = vmatpush1.msra.mxu0 0.0
      %460 = vmatprep.subr.mxu0 0.0
      %461 = vmatpush1.msra.mxu0 0.0
      %462 = vmatprep.subr.mxu0 0.0
      %463 = vmatpush1.msra.mxu0 0.0
      %464 = vmatprep.subr.mxu0 0.0
      %465 = vmatpush1.msra.mxu0 0.0
      %466 = vmatprep.subr.mxu0 0.0
      %467 = vmatpush1.msra.mxu0 0.0
      %468 = vmatprep.subr.mxu0 0.0
      %469 = vmatpush1.msra.mxu0 0.0
      %470 = vmatprep.subr.mxu0 0.0
      %471 = vmatpush1.msra.mxu0 0.0
      %472 = vmatprep.subr.mxu0 0.0
      %473 = vmatpush1.msra.mxu0 0.0
      %474 = vmatprep.subr.mxu0 0.0
      %475 = vmatpush1.msra.mxu0 0.0
      %476 = vmatprep.subr.mxu0 0.0
      %477 = vmatpush1.msra.mxu0 0.0
      %478 = vmatprep.subr.mxu0 0.0
      %479 = vmatpush1.msra.mxu0 0.0
      %480 = vmatprep.subr.mxu0 0.0
      %481 = vmatpush1.msra.mxu0 0.0
      %482 = vmatprep.subr.mxu0 0.0
      %483 = vmatpush1.msra.mxu0 0.0
      %484 = vmatprep.subr.mxu0 0.0
      %485 = vmatpush1.msra.mxu0 0.0
      %486 = vmatprep.subr.mxu0 0.0
      %487 = vmatpush1.msra.mxu0 0.0
      %488 = vmatprep.subr.mxu0 0.0
      %489 = vmatpush1.msra.mxu0 0.0
      %490 = vmatprep.mubr.f32.mxu0 0.0
      %491 = vmatmul.mubr.f32.gmra.mrb[0].mxu0 %v246
      %v492 = vpop.f32.mrb[0].mxu0
      %v493 = vadd.f32 0.0, %v492
      %v494 = vpop.f32.mrb[0].mxu0
      %495 = vmatprep.mubr.f32.mxu0 0.0
      %496 = vmatmul.mubr.f32.gmra.mrb[0].mxu0 %v249
      %v497 = vpop.f32.mrb[0].mxu0
      %v498 = vadd.f32 0.0, %v497
      %v499 = vpop.f32.mrb[0].mxu0
      %500 = vdwg.mxu0
      %v501 = vadd.f32 %v419, %v493
      %v502 = vadd.f32 %v420, %v498
      %503 = vst.msk [vmem:[%s418] sm:$0xff] %vm328, %v501
      %504 = vst.msk [vmem:[%s418 + $0x8] sm:$0xff] %vm328, %v502
      %s505 = scalar_lea.vmem [#allocation2], 48
      %v506 = vld [vmem:[%s505] sm:$0xff]
      %v507 = vld [vmem:[%s505 + $0x8] sm:$0xff]
      %s508 = scalar_lea.vmem %s211, 96
      %v509 = vld [vmem:[%s508] sm:$0xff]
      %v510 = vld [vmem:[%s508 + $0x8] sm:$0xff]
      %v511 = vld [vmem:[%s508 + $0x10] sm:$0xff]
      %v512 = vld [vmem:[%s508 + $0x18] sm:$0xff]
      %513 = vmatprep.subr.mxu0 0.0
      %514 = vmatpush1.msra.mxu0 %v509
      %515 = vmatprep.subr.mxu0 0.0
      %516 = vmatpush1.msra.mxu0 %v510
      %517 = vmatprep.subr.mxu0 0.0
      %518 = vmatpush1.msra.mxu0 %v511
      %519 = vmatprep.subr.mxu0 0.0
      %520 = vmatpush1.msra.mxu0 %v512
      %521 = vmatprep.subr.mxu0 0.0
      %522 = vmatpush1.msra.mxu0 0.0
      %523 = vmatprep.subr.mxu0 0.0
      %524 = vmatpush1.msra.mxu0 0.0
      %525 = vmatprep.subr.mxu0 0.0
      %526 = vmatpush1.msra.mxu0 0.0
      %527 = vmatprep.subr.mxu0 0.0
      %528 = vmatpush1.msra.mxu0 0.0
      %529 = vmatprep.subr.mxu0 0.0
      %530 = vmatpush1.msra.mxu0 0.0
      %531 = vmatprep.subr.mxu0 0.0
      %532 = vmatpush1.msra.mxu0 0.0
      %533 = vmatprep.subr.mxu0 0.0
      %534 = vmatpush1.msra.mxu0 0.0
      %535 = vmatprep.subr.mxu0 0.0
      %536 = vmatpush1.msra.mxu0 0.0
      %537 = vmatprep.subr.mxu0 0.0
      %538 = vmatpush1.msra.mxu0 0.0
      %539 = vmatprep.subr.mxu0 0.0
      %540 = vmatpush1.msra.mxu0 0.0
      %541 = vmatprep.subr.mxu0 0.0
      %542 = vmatpush1.msra.mxu0 0.0
      %543 = vmatprep.subr.mxu0 0.0
      %544 = vmatpush1.msra.mxu0 0.0
      %545 = vmatprep.subr.mxu0 0.0
      %546 = vmatpush1.msra.mxu0 0.0
      %547 = vmatprep.subr.mxu0 0.0
      %548 = vmatpush1.msra.mxu0 0.0
      %549 = vmatprep.subr.mxu0 0.0
      %550 = vmatpush1.msra.mxu0 0.0
      %551 = vmatprep.subr.mxu0 0.0
      %552 = vmatpush1.msra.mxu0 0.0
      %553 = vmatprep.subr.mxu0 0.0
      %554 = vmatpush1.msra.mxu0 0.0
      %555 = vmatprep.subr.mxu0 0.0
      %556 = vmatpush1.msra.mxu0 0.0
      %557 = vmatprep.subr.mxu0 0.0
      %558 = vmatpush1.msra.mxu0 0.0
      %559 = vmatprep.subr.mxu0 0.0
      %560 = vmatpush1.msra.mxu0 0.0
      %561 = vmatprep.subr.mxu0 0.0
      %562 = vmatpush1.msra.mxu0 0.0
      %563 = vmatprep.subr.mxu0 0.0
      %564 = vmatpush1.msra.mxu0 0.0
      %565 = vmatprep.subr.mxu0 0.0
      %566 = vmatpush1.msra.mxu0 0.0
      %567 = vmatprep.subr.mxu0 0.0
      %568 = vmatpush1.msra.mxu0 0.0
      %569 = vmatprep.subr.mxu0 0.0
      %570 = vmatpush1.msra.mxu0 0.0
      %571 = vmatprep.subr.mxu0 0.0
      %572 = vmatpush1.msra.mxu0 0.0
      %573 = vmatprep.subr.mxu0 0.0
      %574 = vmatpush1.msra.mxu0 0.0
      %575 = vmatprep.subr.mxu0 0.0
      %576 = vmatpush1.msra.mxu0 0.0
      %577 = vmatprep.mubr.f32.mxu0 0.0
      %578 = vmatmul.mubr.f32.gmra.mrb[0].mxu0 %v246
      %v579 = vpop.f32.mrb[0].mxu0
      %v580 = vadd.f32 0.0, %v579
      %v581 = vpop.f32.mrb[0].mxu0
      %582 = vmatprep.mubr.f32.mxu0 0.0
      %583 = vmatmul.mubr.f32.gmra.mrb[0].mxu0 %v249
      %v584 = vpop.f32.mrb[0].mxu0
      %v585 = vadd.f32 0.0, %v584
      %v586 = vpop.f32.mrb[0].mxu0
      %587 = vdwg.mxu0
      %v588 = vadd.f32 %v506, %v580
      %v589 = vadd.f32 %v507, %v585
      %590 = vst.msk [vmem:[%s505] sm:$0xff] %vm328, %v588
      %591 = vst.msk [vmem:[%s505 + $0x8] sm:$0xff] %vm328, %v589
      // Predicated region
      $region33: #{tpu_custom_call.1} parent=27 // pred_check
        %p592 = pneg %p223
      $region34: #{tpu_custom_call.1} parent=27 // pred_check_branch
        %594 = sbr.rel (%p592) target = $region36
      $region35: #{tpu_custom_call.1} parent=27 // pred_region
        %v595 = vld [vmem:[#allocation2] sm:$0xff]
        %v596 = vld [vmem:[#allocation2 + $0x8] sm:$0xff]
        %v597 = vld [vmem:[#allocation2 + $0x10] sm:$0xff]
        %v598 = vld [vmem:[#allocation2 + $0x18] sm:$0xff]
        %v599 = vld [vmem:[#allocation2 + $0x20] sm:$0xff]
        %v600 = vld [vmem:[#allocation2 + $0x28] sm:$0xff]
        %v601 = vld [vmem:[#allocation2 + $0x30] sm:$0xff]
        %v602 = vld [vmem:[#allocation2 + $0x38] sm:$0xff]
        %603 = vst.msk [vmem:[%s221] sm:$0xff] %vm328, %v595
        %604 = vst.msk [vmem:[%s221 + $0x8] sm:$0xff] %vm328, %v596
        %605 = vst.msk [vmem:[%s221 + $0x10] sm:$0xff] %vm328, %v597
        %606 = vst.msk [vmem:[%s221 + $0x18] sm:$0xff] %vm328, %v598
        %607 = vst.msk [vmem:[%s221 + $0x20] sm:$0xff] %vm328, %v599
        %608 = vst.msk [vmem:[%s221 + $0x28] sm:$0xff] %vm328, %v600
        %609 = vst.msk [vmem:[%s221 + $0x30] sm:$0xff] %vm328, %v601
        %610 = vst.msk [vmem:[%s221 + $0x38] sm:$0xff] %vm328, %v602
      $region36: #{tpu_custom_call.1} parent=27 // pred_fallthru
        _
      %s611 = smul.u32 2, %s19
      %p612 = scmp.lt.s32.totalorder %s18, 1
      %s613 = scalar_select %p612, %s18, 1
      %p614 = scmp.lt.s32.totalorder %s611, 1
      %s615 = scalar_select %p614, %s611, 1
      %s616 = smul.addr %s613, 8
      %s617 = sadd.s32 %s615, %s616
      %s618 = smul.addr %s617, 8
      %s619 = scalar_lea.vmem %s2, %s618
      // Predicated region
      $region37: #{tpu_custom_call.1} parent=27 // pred_check
        %p620 = pneg %p108
      $region38: #{tpu_custom_call.1} parent=27 // pred_check_branch
        %622 = sbr.rel (%p620) target = $region40
      $region39: #{tpu_custom_call.1} parent=27 // pred_region
        %s623 = smul.u32 2, %s19
      $region40: #{tpu_custom_call.1} parent=27 // pred_fallthru
        _
    $region28: #{tpu_custom_call.1} parent=5 // pred_fallthru
      _
    %p624 = scmp.le.s32.totalorder 2, %s8
    // Predicated region
    $region41: #{tpu_custom_call.1} parent=5 // pred_check
      %p625 = pneg %p624
    $region42: #{tpu_custom_call.1} parent=5 // pred_check_branch
      %627 = sbr.rel (%p625) target = $region44
    $region43: #{tpu_custom_call.1} parent=5 // pred_region
      %s628 = ssub.s32 %s8, 2
      // Predicated region
      $region45: #{tpu_custom_call.1} parent=43 // pred_check
        %p629 = pneg %p114
      $region46: #{tpu_custom_call.1} parent=43 // pred_check_branch
        %631 = sbr.rel (%p629) target = $region48
      $region47: #{tpu_custom_call.1} parent=43 // pred_region
        %s632 = smul.u32 2, %s22
        %p633 = scmp.lt.s32.totalorder %s21, 1
        %s634 = scalar_select %p633, %s21, 1
        %p635 = scmp.lt.s32.totalorder %s632, 1
        %s636 = scalar_select %p635, %s632, 1
        %s637 = smul.addr %s634, 8
        %s638 = sadd.s32 %s636, %s637
        %s639 = smul.addr %s638, 8
        %s640 = scalar_lea.vmem %s2, %s639
      $region48: #{tpu_custom_call.1} parent=43 // pred_fallthru
        _
    $region44: #{tpu_custom_call.1} parent=5 // pred_fallthru
      _
  $region6: #{tpu_custom_call.1} parent=0 // loop_footer
    %s12 = sadd.s32 1, %s8
  $region7: #{tpu_custom_call.1} parent=0 // loop_footer_branch
    %7 = sbr.rel target = $region3
  $region8: #{tpu_custom_call.1} parent=0 // loop_exit
    _

</llo_original>
